<compile_context>
chip_gen: v7x
topology: tpu7x:2x2x1
jax: 0.10.0
libtpu: 0.0.40
codegen_flags: <defaults>
</compile_context>

<pallas_src>
import numpy as np

import jax
import jax.numpy as jnp
from jax.experimental import pallas as pl
from jax.experimental.pallas import tpu as pltpu


def _just_print_kernel(rank_ref, sentinel_ref):
    # Side-effect of the original module: print(self.rank, 'Just Print').
    # rank lives in SMEM as a runtime scalar -> rank-agnostic compilation.
    pl.debug_print("{} Just Print", rank_ref[0])
    # Tiny, real SMEM write so the kernel has a well-defined output with
    # provably zero HBM/VMEM traffic (no touch/add_dependency needed).
    sentinel_ref[0] = rank_ref[0]


def _emit_print_kernel(rank: int):
    """Zero-data side-effect-only pallas_call (SMEM in, SMEM out)."""
    rank_arr = jnp.asarray([rank], dtype=jnp.int32)
    return pl.pallas_call(
        _just_print_kernel,
        out_shape=jax.ShapeDtypeStruct((1,), jnp.int32),
        in_specs=[pl.BlockSpec(memory_space=pltpu.SMEM)],
        out_specs=pl.BlockSpec(memory_space=pltpu.SMEM),
        # Zero declared cost: let XLA overlap surrounding work freely.
        cost_estimate=pl.CostEstimate(flops=0, transcendentals=0,
                                      bytes_accessed=0),
        # Keep the call (and its print side-effect) from being DCE'd.
        compiler_params=pltpu.CompilerParams(has_side_effects=True),
    )(rank_arr)


def just_print(x: jax.Array, rank: int = 0, debug: bool = True) -> jax.Array:
    """Identity forward matching JustPrint.forward (shape/dtype preserved).

    `x` never enters the custom call: it stays on the pure-JAX path, so the
    op is truly zero-cost on the datapath for v5e / v6e / v7x. The print
    side-effect is emitted by a tiny SMEM-only kernel, gated by `debug`.
    """
    if debug:
        # Block on the sentinel so the side-effect kernel has actually run.
        jax.block_until_ready(_emit_print_kernel(rank))
    return x


if __name__ == "__main__":
    key = jax.random.PRNGKey(0)
    # Small NCHW input consistent with a typical conv-model activation.
    x = jax.random.normal(key, (2, 4, 16, 16), dtype=jnp.float32)

    # Host snapshot of the input for an exact-identity check.
    x_host = np.asarray(jax.device_get(x))

    rank = 0  # deterministic "rank" parameter from __init__
    y = just_print(x, rank=rank, debug=True)
    y = jax.block_until_ready(y)

    # Forward must be an exact identity.
    assert y.shape == x_host.shape and y.dtype == x_host.dtype
    assert np.array_equal(np.asarray(jax.device_get(y)), x_host)

    print("KERNEL_OK")
</pallas_src>

<mosaic_0001>
module attributes {stable_mosaic.version = 11 : i64} {
  func.func @_just_print_kernel(%arg0: memref<1xi32, #tpu.memory_space<smem>>, %arg1: memref<1xi32, #tpu.memory_space<smem>>) attributes {dimension_semantics = [], scalar_prefetch = 0 : i64, scratch_operands = 0 : i64, tpu.core_type = #tpu.core_type<tc>} {
    %c0 = arith.constant 0 : index
    %0 = memref.load %arg0[%c0] : memref<1xi32, #tpu.memory_space<smem>>
    tpu.log "$0 Just Print" {formatted = true} : [%0] : i32
    %c0_0 = arith.constant 0 : index
    %1 = memref.load %arg0[%c0_0] : memref<1xi32, #tpu.memory_space<smem>>
    %c0_1 = arith.constant 0 : index
    %2 = memref.load %arg1[%c0_1] : memref<1xi32, #tpu.memory_space<smem>>
    memref.store %1, %arg1[%c0_1] : memref<1xi32, #tpu.memory_space<smem>>
    return
  }
}

</mosaic_0001>

<llo_original>
// kernel: tpu_custom_call.1
$region0: #{tpu_custom_call.1}
  #allocation0 [shape = 'u32[]', space=smem, size = 0x4, offset = 0x4, fixed_abs, tag = 'smem constant byte address 0x4 - core index']
  #allocation1 [shape = 'u32[144,128]{1,0:T(1,128)}', space=vmem, size = 0x12000, scoped, tag = 'internal scratch']
  #allocation2 [shape = 's32[1]{0:T(128)S(6)}', space=smem, size = 0x200, scoped, tag = 'scoped memory for tpu_custom_call.1']
  %s0 = inlined_call_operand.<no memory space> [shape: s32[1], index: 0, kind: input, shape index: {}]
  %s1 = inlined_call_operand.hbm [shape: s32[1], index: 1, kind: output, shape index: {}]
  %s2 = sld [smem:[#allocation0]]
  $region15: #{tpu_custom_call.1} parent=0
    _
  %s4 = ssub.s32 1, %s2
  %s5 = scalar_select 0, %s4, %s2
  %6 = sst [smem:[#allocation2]] %s0
  $region1: #{tpu_custom_call.1} parent=0
    #allocation3 [shape = 'u8[512]{0}', space=smem, size = 0x200, scoped, tag = 'output window, operand 0, single buffered']
    #allocation4 [shape = 's32[1]{0}', space=sflag, size = 0x4, scoped, tag = 'scoped memory for tpu_custom_call.1']
    %7 = vsyncpa [#allocation4], 0
    // Predicated region
    $region2: #{tpu_custom_call.1} parent=1 // pred_check
      _
    $region3: #{tpu_custom_call.1} parent=1 // pred_check_branch
      %9 = sbr.rel (0) target = $region5
    $region4: #{tpu_custom_call.1} parent=1 // pred_region
      _
    $region5: #{tpu_custom_call.1} parent=1 // pred_fallthru
      _
    %s10 = sld [smem:[#allocation2]]
    $region6: #{tpu_custom_call.1} parent=1
      #allocation5 [shape = 's32[1024]{0}', space=smem, size = 0x1000, scoped, tag = 'scoped memory for tpu_custom_call.1']
      %11 = sst [smem:[#allocation5]] %s10
    %s12 = sld [smem:[#allocation2]]
    %s13 = scalar_lea.smem [#allocation3], 0
    %14 = sst [smem:[%s13]] %s12
    // Predicated region
    $region7: #{tpu_custom_call.1} parent=1 // pred_check
      _
    $region8: #{tpu_custom_call.1} parent=1 // pred_check_branch
      %16 = sbr.rel (0) target = $region10
    $region9: #{tpu_custom_call.1} parent=1 // pred_region
      %s18 = ssub.s32 16, 16
      %19 = vsyncadd [#allocation4], %s18
      %22 = dma.smem_to_hbm [#allocation3], 16, %s1, [#allocation4]
    $region10: #{tpu_custom_call.1} parent=1 // pred_fallthru
      _
    // Predicated region
    $region11: #{tpu_custom_call.1} parent=1 // pred_check
      _
    $region12: #{tpu_custom_call.1} parent=1 // pred_check_branch
      %24 = sbr.rel (0) target = $region14
    $region13: #{tpu_custom_call.1} parent=1 // pred_region
      %25 = dma.done [#allocation4], 16
    $region14: #{tpu_custom_call.1} parent=1 // pred_fallthru
      _
    %26 = sfence
    %27 = vsyncpa [#allocation4], 1

</llo_original>
